<compile_context>
chip_gen: v5e
topology: v5e:2x2
jax: 0.10.0
libtpu: 0.0.40
codegen_flags: <defaults>
</compile_context>

<pallas_src>
import functools

import jax
import jax.numpy as jnp
from jax.experimental import pallas as pl
from jax.experimental.pallas import tpu as pltpu


# ---------------------------------------------------------------------------
# Tiling policy
# ---------------------------------------------------------------------------
_TARGET_BLOCK_BYTES = (3 * 1024 * 1024) // 2     # ~1.5 MiB x per block
_MIN_BLOCK_BYTES = 256 * 1024                    # don't shrink blocks below this
_DESIRED_STEPS = 8                               # >= 4 pipelined steps per v7x TC
_MAX_SINGLE_PASS_ROW_BYTES = 2 * 1024 * 1024     # above this -> two-pass scheme
_VMEM_LIMIT_BYTES = 32 * 1024 * 1024             # explicit scoped-VMEM budget


def _choose_block_b(B, row_bytes):
    """Pick batch rows per block for the single-pass kernel."""
    # Largest bt whose block stays within the per-step target (~1-1.5 MiB tiles,
    # where the f32 memcpy roofline already saturates).
    bt = max(1, min(B, _TARGET_BLOCK_BYTES // row_bytes))
    # Prefer a deeper grid (>= _DESIRED_STEPS steps) so in-DMA / compute / out-DMA
    # overlap and both v7x TensorCores get several pipelined steps each, as long
    # as each block still moves >= _MIN_BLOCK_BYTES.
    bt_for_depth = max(1, B // _DESIRED_STEPS)
    if bt_for_depth < bt and bt_for_depth * row_bytes >= _MIN_BLOCK_BYTES:
        bt = bt_for_depth
    # Snap to a divisor of B so no batch padding / output slicing is ever needed.
    while B % bt != 0:
        bt -= 1
    return bt


# ---------------------------------------------------------------------------
# Single-pass kernel: whole rows fit in one block
# ---------------------------------------------------------------------------
def _se_single_pass_kernel(x_ref, w1_ref, b1_ref, w2_ref, b2_ref, o_ref):
    """x/out block: [bt, C, HW] (spatial positions on the lane axis)."""
    # squeeze: AdaptiveAvgPool2d(1) == mean over spatial positions -> [bt, C]
    sq = jnp.mean(x_ref[...].astype(jnp.float32), axis=2)

    # excitation: Linear -> ReLU -> Linear -> Sigmoid (batched over bt rows)
    h = jnp.dot(sq, w1_ref[...], preferred_element_type=jnp.float32) + b1_ref[...]
    h = jnp.maximum(h, 0.0)
    e = jnp.dot(h, w2_ref[...], preferred_element_type=jnp.float32) + b2_ref[...]
    e = jax.nn.sigmoid(e)                                     # [bt, C]

    # scale + final ReLU; re-read x_ref so the big block isn't held live across
    # the matmul chain above.
    o_ref[...] = jnp.maximum(x_ref[...] * e[:, :, None], 0.0).astype(o_ref.dtype)


def _se_single_pass(x_flat, w1, b1_2d, w2, b2_2d, block_b=None):
    B, C, HW = x_flat.shape
    Ch = w1.shape[1]
    dtype = x_flat.dtype
    itemsize = jnp.dtype(dtype).itemsize
    row_bytes = C * HW * itemsize

    bt = int(block_b) if block_b is not None else _choose_block_b(B, row_bytes)
    n_steps = pl.cdiv(B, bt)

    cost = pl.CostEstimate(
        flops=3 * B * C * HW + 4 * B * C * Ch,
        transcendentals=B * C,
        bytes_accessed=2 * B * C * HW * itemsize + 2 * C * Ch * 4 + (C + Ch) * 4,
    )

    return pl.pallas_call(
        _se_single_pass_kernel,
        out_shape=jax.ShapeDtypeStruct((B, C, HW), dtype),
        grid_spec=pltpu.PrefetchScalarGridSpec(
            num_scalar_prefetch=0,
            grid=(n_steps,),
            in_specs=[
                pl.BlockSpec((bt, C, HW), lambda i: (i, 0, 0)),
                # Tiny weights/biases: constant index maps keep them VMEM-resident.
                pl.BlockSpec((C, Ch), lambda i: (0, 0)),
                pl.BlockSpec((1, Ch), lambda i: (0, 0)),
                pl.BlockSpec((Ch, C), lambda i: (0, 0)),
                pl.BlockSpec((1, C), lambda i: (0, 0)),
            ],
            out_specs=pl.BlockSpec((bt, C, HW), lambda i: (i, 0, 0)),
        ),
        compiler_params=pltpu.CompilerParams(
            dimension_semantics=("parallel",),
            vmem_limit_bytes=_VMEM_LIMIT_BYTES),
        cost_estimate=cost,
    )(x_flat, w1, b1_2d, w2, b2_2d)


# ---------------------------------------------------------------------------
# Two-pass fallback: rows too large for a single block
# ---------------------------------------------------------------------------
def _se_squeeze_excite_kernel(x_ref, w1_ref, b1_ref, w2_ref, b2_ref, e_ref, acc_ref,
                              *, hw_total, hw_tile, need_mask):
    """Pass 1. Grid (batch blocks, spatial tiles); x block [bt, C, hw_tile]."""
    s = pl.program_id(1)

    @pl.when(s == 0)
    def _():
        acc_ref[...] = jnp.zeros_like(acc_ref)

    x = x_ref[...].astype(jnp.float32)
    if need_mask:  # ragged boundary spatial tile: zero out-of-range lanes
        pos = s * hw_tile + jax.lax.broadcasted_iota(jnp.int32, x.shape, 2)
        x = jnp.where(pos < hw_total, x, 0.0)
    acc_ref[...] += jnp.sum(x, axis=2)

    @pl.when(s == pl.num_programs(1) - 1)
    def _():
        sq = acc_ref[...] * (1.0 / hw_total)                  # mean -> [bt, C]
        h = jnp.dot(sq, w1_ref[...], preferred_element_type=jnp.float32) + b1_ref[...]
        h = jnp.maximum(h, 0.0)
        e = jnp.dot(h, w2_ref[...], preferred_element_type=jnp.float32) + b2_ref[...]
        e_ref[...] = jax.nn.sigmoid(e)[:, None, :]            # [bt, 1, C]


def _se_scale_kernel(x_ref, e_ref, o_ref):
    """Pass 2. x/out block [bt, C, hw_tile]; e block [bt, 1, C]."""
    scale = jnp.swapaxes(e_ref[...], 1, 2)                    # [bt, C, 1] (tiny XLU)
    o_ref[...] = jnp.maximum(x_ref[...] * scale, 0.0).astype(o_ref.dtype)


def _se_two_pass(x_flat, w1, b1_2d, w2, b2_2d, hw_tile_override=None):
    B, C, HW = x_flat.shape
    Ch = w1.shape[1]
    dtype = x_flat.dtype
    itemsize = jnp.dtype(dtype).itemsize

    if hw_tile_override is not None:
        hw_tile = min(int(hw_tile_override), HW)
    else:
        hw_tile = max(128, (_TARGET_BLOCK_BYTES // (C * itemsize)) // 128 * 128)
        hw_tile = min(hw_tile, HW)
    bt = max(1, min(B, _TARGET_BLOCK_BYTES // max(1, C * hw_tile * itemsize)))

    n_b = pl.cdiv(B, bt)
    n_s = pl.cdiv(HW, hw_tile)
    need_mask = (HW % hw_tile) != 0

    # Pass 1: squeeze (tiled over spatial, accumulated in VMEM) + excitation.
    e = pl.pallas_call(
        functools.partial(_se_squeeze_excite_kernel,
                          hw_total=HW, hw_tile=hw_tile, need_mask=need_mask),
        out_shape=jax.ShapeDtypeStruct((B, 1, C), jnp.float32),
        grid_spec=pltpu.PrefetchScalarGridSpec(
            num_scalar_prefetch=0,
            grid=(n_b, n_s),
            in_specs=[
                pl.BlockSpec((bt, C, hw_tile), lambda b, s: (b, 0, s)),
                pl.BlockSpec((C, Ch), lambda b, s: (0, 0)),
                pl.BlockSpec((1, Ch), lambda b, s: (0, 0)),
                pl.BlockSpec((Ch, C), lambda b, s: (0, 0)),
                pl.BlockSpec((1, C), lambda b, s: (0, 0)),
            ],
            out_specs=pl.BlockSpec((bt, 1, C), lambda b, s: (b, 0, 0)),
            scratch_shapes=[pltpu.VMEM((bt, C), jnp.float32)],
        ),
        compiler_params=pltpu.CompilerParams(
            dimension_semantics=("parallel", "arbitrary"),
            vmem_limit_bytes=_VMEM_LIMIT_BYTES),
        cost_estimate=pl.CostEstimate(
            flops=B * C * HW + 4 * B * C * Ch,
            transcendentals=B * C,
            bytes_accessed=B * C * HW * itemsize + B * C * 4),
    )(x_flat, w1, b1_2d, w2, b2_2d)

    # Pass 2: elementwise scale + ReLU, freely tiled over (batch, spatial).
    out = pl.pallas_call(
        _se_scale_kernel,
        out_shape=jax.ShapeDtypeStruct((B, C, HW), dtype),
        grid_spec=pltpu.PrefetchScalarGridSpec(
            num_scalar_prefetch=0,
            grid=(n_b, n_s),
            in_specs=[
                pl.BlockSpec((bt, C, hw_tile), lambda b, s: (b, 0, s)),
                pl.BlockSpec((bt, 1, C), lambda b, s: (b, 0, 0)),
            ],
            out_specs=pl.BlockSpec((bt, C, hw_tile), lambda b, s: (b, 0, s)),
        ),
        compiler_params=pltpu.CompilerParams(
            dimension_semantics=("parallel", "parallel"),
            vmem_limit_bytes=_VMEM_LIMIT_BYTES),
        cost_estimate=pl.CostEstimate(
            flops=2 * B * C * HW,
            transcendentals=0,
            bytes_accessed=2 * B * C * HW * itemsize + B * C * 4),
    )(x_flat, e)
    return out


# ---------------------------------------------------------------------------
# Public wrapper
# ---------------------------------------------------------------------------
def se_block(x_nchw, w1, b1, w2, b2, *, block_b=None,
             force_two_pass=False, two_pass_hw_tile=None):
    """SEBlock forward.

    x_nchw: [B, C, H, W]
    w1: [C, Ch], b1: [Ch], w2: [Ch, C], b2: [C]   (weights stored [in, out])
    Returns [B, C, H, W].
    """
    B, C, H, W = x_nchw.shape
    HW = H * W
    Ch = w1.shape[1]
    itemsize = jnp.dtype(x_nchw.dtype).itemsize
    row_bytes = C * HW * itemsize

    # Contiguous reshape only (no transpose -> no extra HBM traffic).
    x_flat = x_nchw.reshape(B, C, HW)
    b1_2d = b1.reshape(1, Ch)
    b2_2d = b2.reshape(1, C)

    if force_two_pass or row_bytes > _MAX_SINGLE_PASS_ROW_BYTES:
        out_flat = _se_two_pass(x_flat, w1, b1_2d, w2, b2_2d, two_pass_hw_tile)
    else:
        out_flat = _se_single_pass(x_flat, w1, b1_2d, w2, b2_2d, block_b)
    return out_flat.reshape(B, C, H, W)


def se_block_reference(x, w1, b1, w2, b2):
    sq = jnp.mean(x, axis=(2, 3))                             # [B, C]
    h = jnp.maximum(sq @ w1 + b1, 0.0)
    e = jax.nn.sigmoid(h @ w2 + b2)
    return jnp.maximum(x * e[:, :, None, None], 0.0)


def _make_params(key, C, reduction):
    Ch = max(1, C // reduction)
    kw1, kb1, kw2, kb2 = jax.random.split(key, 4)
    lim1 = 1.0 / jnp.sqrt(C)
    lim2 = 1.0 / jnp.sqrt(Ch)
    w1 = jax.random.uniform(kw1, (C, Ch), minval=-lim1, maxval=lim1, dtype=jnp.float32)
    b1 = jax.random.uniform(kb1, (Ch,), minval=-lim1, maxval=lim1, dtype=jnp.float32)
    w2 = jax.random.uniform(kw2, (Ch, C), minval=-lim2, maxval=lim2, dtype=jnp.float32)
    b2 = jax.random.uniform(kb2, (C,), minval=-lim2, maxval=lim2, dtype=jnp.float32)
    return w1, b1, w2, b2


if __name__ == "__main__":
    key = jax.random.PRNGKey(0)
    kx1, kx2, kx3, kp1, kp2, kp3 = jax.random.split(key, 6)

    # Case 1: SEBlock(channel=32, reduction=16) on 16x16 maps (single-pass path,
    # HW=256 lane-aligned).
    B, C, H, W = 2, 32, 16, 16
    x = jax.random.normal(kx1, (B, C, H, W), dtype=jnp.float32)
    w1, b1, w2, b2 = _make_params(kp1, C, 16)
    out = se_block(x, w1, b1, w2, b2)
    jax.block_until_ready(out)
    ref = se_block_reference(x, w1, b1, w2, b2)
    assert out.shape == (B, C, H, W)
    assert jnp.allclose(out, ref, atol=1e-5, rtol=1e-5), "case 1 mismatch vs reference"

    # Case 2: SEBlock(channel=128, reduction=16) on 7x7 maps (single-pass path,
    # HW=49 not lane-aligned: full-extent blocks, masked stores accepted —
    # no wrapper-side HBM transposes).
    B, C, H, W = 3, 128, 7, 7
    x = jax.random.normal(kx2, (B, C, H, W), dtype=jnp.float32)
    w1, b1, w2, b2 = _make_params(kp2, C, 16)
    out = se_block(x, w1, b1, w2, b2)
    jax.block_until_ready(out)
    ref = se_block_reference(x, w1, b1, w2, b2)
    assert out.shape == (B, C, H, W)
    assert jnp.allclose(out, ref, atol=1e-5, rtol=1e-5), "case 2 mismatch vs reference"

    # Case 3: exercise the two-pass fallback (spatial tiling + ragged-tile
    # masking) at a small shape by forcing it.
    B, C, H, W = 2, 32, 20, 20        # HW = 400, hw_tile = 128 -> masked last tile
    x = jax.random.normal(kx3, (B, C, H, W), dtype=jnp.float32)
    w1, b1, w2, b2 = _make_params(kp3, C, 8)
    out = se_block(x, w1, b1, w2, b2, force_two_pass=True, two_pass_hw_tile=128)
    jax.block_until_ready(out)
    ref = se_block_reference(x, w1, b1, w2, b2)
    assert out.shape == (B, C, H, W)
    assert jnp.allclose(out, ref, atol=1e-5, rtol=1e-5), "case 3 (two-pass) mismatch"

    print("KERNEL_OK")
</pallas_src>

<mosaic_0001>
module attributes {stable_mosaic.version = 11 : i64} {
  func.func @_se_single_pass_kernel(%arg0: i32, %arg1: memref<2x32x256xf32, #tpu.memory_space<vmem>>, %arg2: memref<32x2xf32, #tpu.memory_space<vmem>>, %arg3: memref<1x2xf32, #tpu.memory_space<vmem>>, %arg4: memref<2x32xf32, #tpu.memory_space<vmem>>, %arg5: memref<1x32xf32, #tpu.memory_space<vmem>>, %arg6: memref<2x32x256xf32, #tpu.memory_space<vmem>>) attributes {dimension_semantics = [#tpu.dimension_semantics<parallel>], iteration_bounds = array<i64: 1>, scalar_prefetch = 0 : i64, scratch_operands = 0 : i64, tpu.core_type = #tpu.core_type<tc>, window_params = [{transform_indices = @transform_0, window_bounds = array<i64: 2, 32, 256>}, {pipeline_mode = #tpu.pipeline_mode<synchronous>, transform_indices = @transform_1, window_bounds = array<i64: 32, 2>}, {pipeline_mode = #tpu.pipeline_mode<synchronous>, transform_indices = @transform_2, window_bounds = array<i64: 1, 2>}, {pipeline_mode = #tpu.pipeline_mode<synchronous>, transform_indices = @transform_3, window_bounds = array<i64: 2, 32>}, {pipeline_mode = #tpu.pipeline_mode<synchronous>, transform_indices = @transform_4, window_bounds = array<i64: 1, 32>}, {transform_indices = @transform_5, window_bounds = array<i64: 2, 32, 256>}]} {
    %c0 = arith.constant 0 : index
    %c0_0 = arith.constant 0 : index
    %c0_1 = arith.constant 0 : index
    %0 = vector.load %arg1[%c0, %c0_0, %c0_1] : memref<2x32x256xf32, #tpu.memory_space<vmem>>, vector<2x32x256xf32>
    %cst = arith.constant dense<0.000000e+00> : vector<2x32xf32>
    %1 = vector.multi_reduction <add>, %0, %cst [2] : vector<2x32x256xf32> to vector<2x32xf32>
    %cst_2 = arith.constant 2.560000e+02 : f32
    %2 = vector.broadcast %cst_2 : f32 to vector<2x32xf32>
    %3 = arith.divf %1, %2 : vector<2x32xf32>
    %c0_3 = arith.constant 0 : index
    %c0_4 = arith.constant 0 : index
    %4 = vector.load %arg2[%c0_3, %c0_4] : memref<32x2xf32, #tpu.memory_space<vmem>>, vector<32x2xf32>
    %cst_5 = arith.constant dense<0.000000e+00> : vector<2x2xf32>
    %5 = tpu.matmul %3, %4, %cst_5 {dimension_numbers = #tpu.dot_dimension_numbers<[1], [0], [0], [1], [0, 0, 1, 1], [], []>} : vector<2x32xf32>, vector<32x2xf32>, vector<2x2xf32> -> vector<2x2xf32>
    %c0_6 = arith.constant 0 : index
    %c0_7 = arith.constant 0 : index
    %6 = vector.load %arg3[%c0_6, %c0_7] : memref<1x2xf32, #tpu.memory_space<vmem>>, vector<1x2xf32>
    %7 = vector.broadcast %6 : vector<1x2xf32> to vector<2x2xf32>
    %8 = arith.addf %5, %7 : vector<2x2xf32>
    %cst_8 = arith.constant 0.000000e+00 : f32
    %9 = vector.broadcast %cst_8 : f32 to vector<2x2xf32>
    %10 = arith.maximumf %8, %9 : vector<2x2xf32>
    %c0_9 = arith.constant 0 : index
    %c0_10 = arith.constant 0 : index
    %11 = vector.load %arg4[%c0_9, %c0_10] : memref<2x32xf32, #tpu.memory_space<vmem>>, vector<2x32xf32>
    %cst_11 = arith.constant dense<0.000000e+00> : vector<2x32xf32>
    %12 = tpu.matmul %10, %11, %cst_11 {dimension_numbers = #tpu.dot_dimension_numbers<[1], [0], [0], [1], [0, 0, 1, 1], [], []>} : vector<2x2xf32>, vector<2x32xf32>, vector<2x32xf32> -> vector<2x32xf32>
    %c0_12 = arith.constant 0 : index
    %c0_13 = arith.constant 0 : index
    %13 = vector.load %arg5[%c0_12, %c0_13] : memref<1x32xf32, #tpu.memory_space<vmem>>, vector<1x32xf32>
    %14 = vector.broadcast %13 : vector<1x32xf32> to vector<2x32xf32>
    %15 = arith.addf %12, %14 : vector<2x32xf32>
    %16 = arith.negf %15 : vector<2x32xf32>
    %17 = math.exp %16 : vector<2x32xf32>
    %cst_14 = arith.constant 1.000000e+00 : f32
    %18 = vector.broadcast %cst_14 : f32 to vector<2x32xf32>
    %19 = arith.addf %18, %17 : vector<2x32xf32>
    %20 = arith.divf %18, %19 : vector<2x32xf32>
    %c0_15 = arith.constant 0 : index
    %c0_16 = arith.constant 0 : index
    %c0_17 = arith.constant 0 : index
    %21 = vector.load %arg1[%c0_15, %c0_16, %c0_17] : memref<2x32x256xf32, #tpu.memory_space<vmem>>, vector<2x32x256xf32>
    %22 = vector.shape_cast %20 : vector<2x32xf32> to vector<2x32x1xf32>
    %23 = vector.broadcast %22 : vector<2x32x1xf32> to vector<2x32x256xf32>
    %24 = arith.mulf %21, %23 : vector<2x32x256xf32>
    %cst_18 = arith.constant 0.000000e+00 : f32
    %25 = vector.broadcast %cst_18 : f32 to vector<2x32x256xf32>
    %26 = arith.maximumf %24, %25 : vector<2x32x256xf32>
    %c0_19 = arith.constant 0 : index
    %c0_20 = arith.constant 0 : index
    %c0_21 = arith.constant 0 : index
    %27 = vector.load %arg6[%c0_19, %c0_20, %c0_21] : memref<2x32x256xf32, #tpu.memory_space<vmem>>, vector<2x32x256xf32>
    tpu.vector_store %arg6[%c0_19, %c0_20, %c0_21], %26 {strides = array<i32>} : memref<2x32x256xf32, #tpu.memory_space<vmem>>, vector<2x32x256xf32>,
    return
  }
  func.func @transform_0(%arg0: i32) -> (i32, i32, i32) {
    %c0_i32 = arith.constant 0 : i32
    %c0_i32_0 = arith.constant 0 : i32
    %c0_i32_1 = arith.constant 0 : i32
    return %arg0, %c0_i32, %c0_i32_0 : i32, i32, i32
  }
  func.func @transform_1(%arg0: i32) -> (i32, i32) {
    %c0_i32 = arith.constant 0 : i32
    %c0_i32_0 = arith.constant 0 : i32
    %c0_i32_1 = arith.constant 0 : i32
    return %c0_i32, %c0_i32_0 : i32, i32
  }
  func.func @transform_2(%arg0: i32) -> (i32, i32) {
    %c0_i32 = arith.constant 0 : i32
    %c0_i32_0 = arith.constant 0 : i32
    %c0_i32_1 = arith.constant 0 : i32
    return %c0_i32, %c0_i32_0 : i32, i32
  }
  func.func @transform_3(%arg0: i32) -> (i32, i32) {
    %c0_i32 = arith.constant 0 : i32
    %c0_i32_0 = arith.constant 0 : i32
    %c0_i32_1 = arith.constant 0 : i32
    return %c0_i32, %c0_i32_0 : i32, i32
  }
  func.func @transform_4(%arg0: i32) -> (i32, i32) {
    %c0_i32 = arith.constant 0 : i32
    %c0_i32_0 = arith.constant 0 : i32
    %c0_i32_1 = arith.constant 0 : i32
    return %c0_i32, %c0_i32_0 : i32, i32
  }
  func.func @transform_5(%arg0: i32) -> (i32, i32, i32) {
    %c0_i32 = arith.constant 0 : i32
    %c0_i32_0 = arith.constant 0 : i32
    %c0_i32_1 = arith.constant 0 : i32
    return %arg0, %c0_i32, %c0_i32_0 : i32, i32, i32
  }
}

</mosaic_0001>

<llo_original>
// kernel: tpu_custom_call.1
$region0: #{tpu_custom_call.1}
  #allocation0 [shape = 'u32[]', space=smem, size = 0x4, offset = 0x4, fixed_abs, tag = 'smem constant byte address 0x4 - core index']
  #allocation1 [shape = 'u32[72,128]{1,0:T(1,128)}', space=vmem, size = 0x9000, scoped, tag = 'internal scratch']
  %s0 = inlined_call_operand.hbm [shape: f32[2,32,256], index: 0, kind: input, shape index: {}]
  %s1 = inlined_call_operand.vmem [shape: f32[32,2], index: 1, kind: input, shape index: {}]
  %s2 = inlined_call_operand.vmem [shape: f32[1,2], index: 2, kind: input, shape index: {}]
  %s3 = inlined_call_operand.vmem [shape: f32[2,32], index: 3, kind: input, shape index: {}]
  %s4 = inlined_call_operand.vmem [shape: f32[1,32], index: 4, kind: input, shape index: {}]
  %s5 = inlined_call_operand.hbm [shape: f32[2,32,256], index: 5, kind: output, shape index: {}]
  %s6 = sld [smem:[#allocation0]]
  $region34: #{tpu_custom_call.1} parent=0
    _
  %s8 = ssub.s32 1, %s6
  %s9 = scalar_select 0, %s8, %s6
  $region1: #{tpu_custom_call.1} parent=0
    #allocation2 [shape = 'u8[65536]{0}', space=vmem, size = 0x10000, scoped, tag = 'input window, operand 0, single buffered']
    #allocation3 [shape = 's32[1]{0}', space=sflag, size = 0x4, scoped, tag = 'scoped memory for tpu_custom_call.1']
    #allocation4 [shape = 's32[1]{0}', space=sflag, size = 0x4, scoped, tag = 'scoped memory for tpu_custom_call.1']
    #allocation5 [shape = 'u8[65536]{0}', space=vmem, size = 0x10000, scoped, tag = 'output window, operand 0, single buffered']
    %10 = vsyncpa [#allocation3], 0
    %11 = vsyncpa [#allocation4], 0
    // Predicated region
    $region2: #{tpu_custom_call.1} parent=1 // pred_check
      _
    $region3: #{tpu_custom_call.1} parent=1 // pred_check_branch
      %13 = sbr.rel (0) target = $region5
    $region4: #{tpu_custom_call.1} parent=1 // pred_region
      %15 = vsyncadd [#allocation3], 0
      %s16 = sshll.u32 %s0, 4
      %s17 = int_to_ptr.hbm [resolvable:$true] %s16
      %s18 = sshll.u32 [#allocation2], 4
      %s19 = int_to_ptr.vmem [resolvable:$true] %s18
      %24 = dma.hbm_to_vmem [thread:$0]  %s17, 2048, %s19, [#allocation3], 256, 256, 16
    $region5: #{tpu_custom_call.1} parent=1 // pred_fallthru
      _
    // Predicated region
    $region6: #{tpu_custom_call.1} parent=1 // pred_check
      _
    $region7: #{tpu_custom_call.1} parent=1 // pred_check_branch
      %26 = sbr.rel (0) target = $region9
    $region8: #{tpu_custom_call.1} parent=1 // pred_region
      _
    $region9: #{tpu_custom_call.1} parent=1 // pred_fallthru
      _
    // Predicated region
    $region10: #{tpu_custom_call.1} parent=1 // pred_check
      _
    $region11: #{tpu_custom_call.1} parent=1 // pred_check_branch
      %28 = sbr.rel (0) target = $region13
    $region12: #{tpu_custom_call.1} parent=1 // pred_region
      _
    $region13: #{tpu_custom_call.1} parent=1 // pred_fallthru
      _
    // Predicated region
    $region14: #{tpu_custom_call.1} parent=1 // pred_check
      _
    $region15: #{tpu_custom_call.1} parent=1 // pred_check_branch
      %30 = sbr.rel (0) target = $region17
    $region16: #{tpu_custom_call.1} parent=1 // pred_region
      _
    $region17: #{tpu_custom_call.1} parent=1 // pred_fallthru
      _
    // Predicated region
    $region18: #{tpu_custom_call.1} parent=1 // pred_check
      _
    $region19: #{tpu_custom_call.1} parent=1 // pred_check_branch
      %32 = sbr.rel (0) target = $region21
    $region20: #{tpu_custom_call.1} parent=1 // pred_region
      _
    $region21: #{tpu_custom_call.1} parent=1 // pred_fallthru
      _
    // Predicated region
    $region22: #{tpu_custom_call.1} parent=1 // pred_check
      _
    $region23: #{tpu_custom_call.1} parent=1 // pred_check_branch
      %34 = sbr.rel (0) target = $region25
    $region24: #{tpu_custom_call.1} parent=1 // pred_region
      %36 = dma.done [#allocation3], 2048
    $region25: #{tpu_custom_call.1} parent=1 // pred_fallthru
      _
    %v37 = vld [vmem:[#allocation2] sm:$0xff]
    %v38 = vld [vmem:[#allocation2 + $0x8] sm:$0xff]
    %v39 = vld [vmem:[#allocation2 + $0x10] sm:$0xff]
    %v40 = vld [vmem:[#allocation2 + $0x18] sm:$0xff]
    %v41 = vld [vmem:[#allocation2 + $0x20] sm:$0xff]
    %v42 = vld [vmem:[#allocation2 + $0x28] sm:$0xff]
    %v43 = vld [vmem:[#allocation2 + $0x30] sm:$0xff]
    %v44 = vld [vmem:[#allocation2 + $0x38] sm:$0xff]
    %v45 = vld [vmem:[#allocation2 + $0x40] sm:$0xff]
    %v46 = vld [vmem:[#allocation2 + $0x48] sm:$0xff]
    %v47 = vld [vmem:[#allocation2 + $0x50] sm:$0xff]
    %v48 = vld [vmem:[#allocation2 + $0x58] sm:$0xff]
    %v49 = vld [vmem:[#allocation2 + $0x60] sm:$0xff]
    %v50 = vld [vmem:[#allocation2 + $0x68] sm:$0xff]
    %v51 = vld [vmem:[#allocation2 + $0x70] sm:$0xff]
    %v52 = vld [vmem:[#allocation2 + $0x78] sm:$0xff]
    %v53 = vadd.f32 %v37, %v38
    %54 = vadd.xlane.f32.xlu0 %v53
    %v55 = vpop.xlane.xlu0 %54
    %v56 = vadd.f32 %v39, %v40
    %57 = vadd.xlane.f32.xlu0 %v56
    %v58 = vpop.xlane.xlu0 %57
    %v59 = vadd.f32 %v41, %v42
    %60 = vadd.xlane.f32.xlu0 %v59
    %v61 = vpop.xlane.xlu0 %60
    %v62 = vadd.f32 %v43, %v44
    %63 = vadd.xlane.f32.xlu0 %v62
    %v64 = vpop.xlane.xlu0 %63
    %v65 = vadd.f32 %v45, %v46
    %66 = vadd.xlane.f32.xlu0 %v65
    %v67 = vpop.xlane.xlu0 %66
    %v68 = vadd.f32 %v47, %v48
    %69 = vadd.xlane.f32.xlu0 %v68
    %v70 = vpop.xlane.xlu0 %69
    %v71 = vadd.f32 %v49, %v50
    %72 = vadd.xlane.f32.xlu0 %v71
    %v73 = vpop.xlane.xlu0 %72
    %v74 = vadd.f32 %v51, %v52
    %75 = vadd.xlane.f32.xlu0 %v74
    %v76 = vpop.xlane.xlu0 %75
    %v77 = vrcp.pop 256.0
    %v78 = vmul.f32 256.0, %v77
    %v79 = vsub.f32 1.0, %v78
    %v80 = vmul.f32 %v77, %v79
    %v81 = vadd.f32 %v77, %v80
    %vm82 = vweird.f32 %v77
    %v83 = vsel %vm82, %v77, %v81
    %v84 = vmul.f32 %v55, %v83
    %v85 = vmul.f32 %v58, %v83
    %v86 = vmul.f32 %v61, %v83
    %v87 = vmul.f32 %v64, %v83
    %v88 = vmul.f32 %v67, %v83
    %v89 = vmul.f32 %v70, %v83
    %v90 = vmul.f32 %v73, %v83
    %v91 = vmul.f32 %v76, %v83
    %v92 = vld [vmem:[%s1] sm:$0xff]
    %v93 = vld [vmem:[%s1 + $0x8] sm:$0xff]
    %v94 = vld [vmem:[%s1 + $0x10] sm:$0xff]
    %v95 = vld [vmem:[%s1 + $0x18] sm:$0xff]
    %v96 = vld [vmem:[%s2] sm:$0x1]
    %v98 = vperm.slane %v96, 0
    %v108 = vlaneseq
    %v109 = vand.u32 %v108, 127
    %v110 = vperm.slane %v84, %v109
    %v111 = vadd.s32 %v109, 4294967288
    %v112 = vperm.slane %v85, %v111
    %vm113 = vcmask 130112
    %v114 = vsel %vm113, %v112, %v110
    %v115 = vadd.s32 %v109, 4294967280
    %v116 = vperm.slane %v86, %v115
    %vm117 = vcmask 195712
    %v118 = vsel %vm117, %v116, %v114
    %v119 = vadd.s32 %v109, 4294967272
    %v120 = vperm.slane %v87, %v119
    %vm121 = vcmask 261312
    %v122 = vsel %vm121, %v120, %v118
    %v123 = vperm.slane %v88, %v109
    %v124 = vperm.slane %v89, %v111
    %v125 = vsel %vm113, %v124, %v123
    %v126 = vperm.slane %v90, %v115
    %v127 = vsel %vm117, %v126, %v125
    %v128 = vperm.slane %v91, %v119
    %v129 = vsel %vm121, %v128, %v127
    %vm130 = vcmask 1041409
    %v131 = vsel %vm130, %v129, %v122
    %vm132 = vcmask 261120
    %v133 = vsel %vm132, %v131, 0
    %135 = vmatpush.msra.mxu0 0.0
    %136 = vmatpush.msra.mxu0 0.0
    %137 = vmatpush.msra.mxu0 0.0
    %138 = vmatpush.msra.mxu0 0.0
    %139 = vmatpush.msra.mxu0 0.0
    %140 = vmatpush.msra.mxu0 0.0
    %141 = vmatpush.msra.mxu0 0.0
    %142 = vmatpush.msra.mxu0 0.0
    %143 = vmatpush.msra.mxu0 0.0
    %144 = vmatpush.msra.mxu0 0.0
    %145 = vmatpush.msra.mxu0 0.0
    %146 = vmatpush.msra.mxu0 0.0
    %147 = vmatpush.msra.mxu0 %v95
    %148 = vmatpush.msra.mxu0 %v94
    %149 = vmatpush.msra.mxu0 %v93
    %150 = vmatpush.msra.mxu0 %v92
    %151 = vmatmul.f32.gmra.mxu0 %v133
    %v152 = vpop.f32.mrf.mxu0
    %v153 = vadd.f32 %v98, %v152
    %154 = vdwg.mxu0
    %v155 = vmax.f32 %v153, 0.0
    %v156 = vld [vmem:[%s3] sm:$0x3]
    %v157 = vld [vmem:[%s4] sm:$0x1]
    %v159 = vperm.slane %v157, 0
    %vm161 = vcmask 15360
    %v163 = vsel %vm161, %v155, 0
    %vm165 = vcmask 1041408
    %v167 = vsel %vm165, %v156, 0
    %169 = vmatpush.msra.mxu0 0.0
    %170 = vmatpush.msra.mxu0 0.0
    %171 = vmatpush.msra.mxu0 0.0
    %172 = vmatpush.msra.mxu0 0.0
    %173 = vmatpush.msra.mxu0 0.0
    %174 = vmatpush.msra.mxu0 0.0
    %175 = vmatpush.msra.mxu0 0.0
    %176 = vmatpush.msra.mxu0 0.0
    %177 = vmatpush.msra.mxu0 0.0
    %178 = vmatpush.msra.mxu0 0.0
    %179 = vmatpush.msra.mxu0 0.0
    %180 = vmatpush.msra.mxu0 0.0
    %181 = vmatpush.msra.mxu0 0.0
    %182 = vmatpush.msra.mxu0 0.0
    %183 = vmatpush.msra.mxu0 0.0
    %184 = vmatpush.msra.mxu0 %v167
    %185 = vmatmul.f32.gmra.mxu0 %v163
    %v186 = vpop.f32.mrf.mxu0
    %v187 = vadd.f32 %v159, %v186
    %188 = vdwg.mxu0
    %v189 = vxor.u32 %v187, 2147483648
    %v190 = vmul.f32 %v189, 1.442695
    %v191 = vpow.pop %v190
    %v192 = vadd.f32 %v191, 1.0
    %v193 = vrcp.pop %v192
    %v194 = vmul.f32 %v192, %v193
    %v195 = vsub.f32 1.0, %v194
    %v196 = vmul.f32 %v193, %v195
    %v197 = vadd.f32 %v193, %v196
    %vm198 = vweird.f32 %v192
    %vm199 = vweird.f32 %v193
    %vm200 = vmor %vm198, %vm199
    %v201 = vsel %vm200, %v193, %v197
    %v202 = vand.u32 2147483647, %v192
    %vm203 = vcmp.eq.f32.partialorder %v202, 8.507059e+37
    %v204 = vand.u32 %v192, 2147483648
    %v205 = vor.u32 1.1754944e-38, %v204
    %v206 = vsel %vm203, %v205, %v201
    %v207 = vmul.f32 1.0, %v206
    %v208 = vperm.slane %v207, 0
    %v209 = vlaneseq
    %v210 = vshrl.u32 %v209, 7
    %212 = vset.pattern.permute.xlu0 %v210
    %213 = vperm.xlu0 %212, %v208
    %v214 = vpop.permute.xlu0 %213
    %v215 = vlaneseq
    %v216 = vshrl.u32 %v215, 7
    %v217 = vadd.s32 %v216, 8
    %218 = vset.pattern.permute.xlu0 %v217
    %219 = vperm.xlu0 %218, %v208
    %v220 = vpop.permute.xlu0 %219
    %v221 = vlaneseq
    %v222 = vshrl.u32 %v221, 7
    %v223 = vadd.s32 %v222, 16
    %224 = vset.pattern.permute.xlu0 %v223
    %225 = vperm.xlu0 %224, %v208
    %v226 = vpop.permute.xlu0 %225
    %v227 = vlaneseq
    %v228 = vshrl.u32 %v227, 7
    %v229 = vadd.s32 %v228, 24
    %230 = vset.pattern.permute.xlu0 %v229
    %231 = vperm.xlu0 %230, %v208
    %v232 = vpop.permute.xlu0 %231
    %v233 = vperm.slane %v207, 1
    %v234 = vlaneseq
    %v235 = vshrl.u32 %v234, 7
    %237 = vset.pattern.permute.xlu0 %v235
    %238 = vperm.xlu0 %237, %v233
    %v239 = vpop.permute.xlu0 %238
    %v240 = vlaneseq
    %v241 = vshrl.u32 %v240, 7
    %v242 = vadd.s32 %v241, 8
    %243 = vset.pattern.permute.xlu0 %v242
    %244 = vperm.xlu0 %243, %v233
    %v245 = vpop.permute.xlu0 %244
    %v246 = vlaneseq
    %v247 = vshrl.u32 %v246, 7
    %v248 = vadd.s32 %v247, 16
    %249 = vset.pattern.permute.xlu0 %v248
    %250 = vperm.xlu0 %249, %v233
    %v251 = vpop.permute.xlu0 %250
    %v252 = vlaneseq
    %v253 = vshrl.u32 %v252, 7
    %v254 = vadd.s32 %v253, 24
    %255 = vset.pattern.permute.xlu0 %v254
    %256 = vperm.xlu0 %255, %v233
    %v257 = vpop.permute.xlu0 %256
    %v258 = vmul.f32 %v37, %v214
    %v259 = vmul.f32 %v38, %v214
    %v260 = vmul.f32 %v39, %v220
    %v261 = vmul.f32 %v40, %v220
    %v262 = vmul.f32 %v41, %v226
    %v263 = vmul.f32 %v42, %v226
    %v264 = vmul.f32 %v43, %v232
    %v265 = vmul.f32 %v44, %v232
    %v266 = vmul.f32 %v45, %v239
    %v267 = vmul.f32 %v46, %v239
    %v268 = vmul.f32 %v47, %v245
    %v269 = vmul.f32 %v48, %v245
    %v270 = vmul.f32 %v49, %v251
    %v271 = vmul.f32 %v50, %v251
    %v272 = vmul.f32 %v51, %v257
    %v273 = vmul.f32 %v52, %v257
    %v274 = vmax.f32 %v258, 0.0
    %v275 = vmax.f32 %v259, 0.0
    %v276 = vmax.f32 %v260, 0.0
    %v277 = vmax.f32 %v261, 0.0
    %v278 = vmax.f32 %v262, 0.0
    %v279 = vmax.f32 %v263, 0.0
    %v280 = vmax.f32 %v264, 0.0
    %v281 = vmax.f32 %v265, 0.0
    %v282 = vmax.f32 %v266, 0.0
    %v283 = vmax.f32 %v267, 0.0
    %v284 = vmax.f32 %v268, 0.0
    %v285 = vmax.f32 %v269, 0.0
    %v286 = vmax.f32 %v270, 0.0
    %v287 = vmax.f32 %v271, 0.0
    %v288 = vmax.f32 %v272, 0.0
    %v289 = vmax.f32 %v273, 0.0
    %290 = vst [vmem:[#allocation5] sm:$0xff] %v274
    %291 = vst [vmem:[#allocation5 + $0x8] sm:$0xff] %v275
    %292 = vst [vmem:[#allocation5 + $0x10] sm:$0xff] %v276
    %293 = vst [vmem:[#allocation5 + $0x18] sm:$0xff] %v277
    %294 = vst [vmem:[#allocation5 + $0x20] sm:$0xff] %v278
    %295 = vst [vmem:[#allocation5 + $0x28] sm:$0xff] %v279
    %296 = vst [vmem:[#allocation5 + $0x30] sm:$0xff] %v280
    %297 = vst [vmem:[#allocation5 + $0x38] sm:$0xff] %v281
    %298 = vst [vmem:[#allocation5 + $0x40] sm:$0xff] %v282
    %299 = vst [vmem:[#allocation5 + $0x48] sm:$0xff] %v283
    %300 = vst [vmem:[#allocation5 + $0x50] sm:$0xff] %v284
    %301 = vst [vmem:[#allocation5 + $0x58] sm:$0xff] %v285
    %302 = vst [vmem:[#allocation5 + $0x60] sm:$0xff] %v286
    %303 = vst [vmem:[#allocation5 + $0x68] sm:$0xff] %v287
    %304 = vst [vmem:[#allocation5 + $0x70] sm:$0xff] %v288
    %305 = vst [vmem:[#allocation5 + $0x78] sm:$0xff] %v289
    // Predicated region
    $region26: #{tpu_custom_call.1} parent=1 // pred_check
      _
    $region27: #{tpu_custom_call.1} parent=1 // pred_check_branch
      %307 = sbr.rel (0) target = $region29
    $region28: #{tpu_custom_call.1} parent=1 // pred_region
      %309 = vsyncadd [#allocation4], 0
      %s310 = sshll.u32 [#allocation5], 4
      %s311 = int_to_ptr.vmem [resolvable:$true] %s310
      %s312 = sshll.u32 %s5, 4
      %s313 = int_to_ptr.hbm [resolvable:$true] %s312
      %318 = dma.vmem_to_hbm [thread:$0]  %s311, 2048, %s313, [#allocation4], 256, 256, 16
    $region29: #{tpu_custom_call.1} parent=1 // pred_fallthru
      _
    // Predicated region
    $region30: #{tpu_custom_call.1} parent=1 // pred_check
      _
    $region31: #{tpu_custom_call.1} parent=1 // pred_check_branch
      %320 = sbr.rel (0) target = $region33
    $region32: #{tpu_custom_call.1} parent=1 // pred_region
      %322 = dma.done [#allocation4], 2048
    $region33: #{tpu_custom_call.1} parent=1 // pred_fallthru
      _
    %323 = vsyncpa [#allocation3], 1
    %324 = vsyncpa [#allocation4], 1

</llo_original>
